<compile_context>
chip_gen: v6e
topology: v6e:2x2x1
jax: 0.10.0
libtpu: 0.0.40
codegen_flags: <defaults>
</compile_context>

<pallas_src>
import jax
import jax.numpy as jnp
from jax import lax
from jax.experimental import pallas as pl
from jax.experimental.pallas import tpu as pltpu


def _round_up(v, m):
    return ((v + m - 1) // m) * m


def _vmem_limit_bytes():
    """Generation-aware VMEM limit: ~3/4 of physical per-core VMEM
    (~96 MiB on v5e/v6e's 128 MiB, ~48 MiB on v7x's 64 MiB)."""
    cap = 0
    try:
        cap = int(getattr(pltpu.get_tpu_info(), "vmem_capacity_bytes", 0))
    except Exception:
        cap = 0
    if cap <= 0:
        cap = 64 * 1024 * 1024          # conservative fallback: v7x per-TC VMEM
    return (cap * 3) // 4


def _choose_tile_rows(m, d, itemsize, vmem_limit):
    # Largest 128-aligned row tile whose double-buffered x stream
    # (2 * tm * d * itemsize) fits the budget: the vmem limit minus headroom
    # for the resident weight row, output blocks and Mosaic internal scratch,
    # capped at 48 MiB of x stream.  Big tiles amortize the ~0.35 us fixed
    # per-grid-step overhead against the HBM DMA time.
    x_budget = min(vmem_limit - 8 * 1024 * 1024, 48 * 1024 * 1024)
    x_budget = max(x_budget, 4 * 1024 * 1024)
    tm = x_budget // (2 * d * itemsize)
    tm = max(128, (tm // 128) * 128)
    m_aligned = _round_up(m, 128)
    if tm >= m_aligned:
        # Whole problem fits in one tile.  For large M keep >= 2 grid steps so
        # the "parallel" grid axis can still be split across v7x's two
        # TensorCores; a second step costs ~0.35 us elsewhere (negligible).
        if m >= 256:
            tm = max(128, _round_up(-(-m // 2), 128))
        else:
            tm = m_aligned
    return tm


def _logistic_kernel(x_ref, w_ref, b_ref, o_ref):
    # x_ref: (tm, D)    input row tile (VMEM, double-buffered by BlockSpec)
    # w_ref: (1, D)     lane-major weight row (constant block index -> resident)
    # b_ref: (1,)       bias scalar (SMEM)
    # o_ref: (1, 1, tm) lane-dense output row for this tile
    #
    # Contract on the last axis with the weight as LHS: the MXU result is the
    # lane-dense (1, tm) row directly, so bias add / sigmoid run on
    # ceil(tm/128) dense vregs (not ceil(tm/8) single-lane ones) and the store
    # is an unmasked full-lane vst.
    logits = lax.dot_general(
        w_ref[...], x_ref[...],
        dimension_numbers=(((1,), (1,)), ((), ())),
        preferred_element_type=jnp.float32)             # (1, tm) f32
    probs = jax.nn.sigmoid(logits + b_ref[0])           # (1, tm) f32
    o_ref[...] = probs[None, :, :].astype(o_ref.dtype)


def logistic_regression_forward(x, weight, bias, *, tm=None):
    """sigmoid(x @ weight.T + bias), per time step.

    x:      (seq_len, batch_size, input_size)  -- f32 or bf16 (bf16 halves the
            HBM stream; accumulation and sigmoid stay in f32)
    weight: (1, input_size)   -- PyTorch nn.Linear(input_size, 1) layout
    bias:   (1,)
    returns (seq_len, batch_size, 1) in x.dtype.
    """
    seq_len, batch_size, input_size = x.shape
    assert weight.shape == (1, input_size)

    M = seq_len * batch_size
    itemsize = jnp.dtype(x.dtype).itemsize
    vmem_limit = _vmem_limit_bytes()
    if tm is None:
        tm = _choose_tile_rows(M, input_size, itemsize, vmem_limit)
    else:
        tm = max(128, _round_up(tm, 128))    # keep output lane-dense / unmasked

    num_tiles = pl.cdiv(M, tm)

    # No jnp.pad: the ragged last x tile is a partial block (rows past M are
    # undefined); each output row depends only on its own input row, and the
    # garbage tail rows are sliced off below.  Do NOT add cross-row reductions
    # without restoring explicit masking/padding.
    x2d = x.reshape(M, input_size)
    w_row = weight.astype(x.dtype)              # (1, D) lane-major, resident
    b1 = bias.reshape(1).astype(jnp.float32)    # scalar bias in SMEM

    out = pl.pallas_call(
        _logistic_kernel,
        out_shape=jax.ShapeDtypeStruct((num_tiles, 1, tm), x.dtype),
        grid=(num_tiles,),
        in_specs=[
            pl.BlockSpec((tm, input_size), lambda i: (i, 0)),    # x row tile
            pl.BlockSpec((1, input_size), lambda i: (0, 0)),     # weight row
            pl.BlockSpec(memory_space=pltpu.MemorySpace.SMEM),   # bias scalar
        ],
        out_specs=pl.BlockSpec((1, 1, tm), lambda i: (i, 0, 0)), # lane-dense row
        compiler_params=pltpu.CompilerParams(
            dimension_semantics=("parallel",),
            vmem_limit_bytes=vmem_limit,
        ),
    )(x2d, w_row, b1)

    scores = out.reshape(num_tiles * tm)[:M].reshape(seq_len, batch_size, 1)
    return scores


if __name__ == "__main__":
    # Small shapes consistent with the module's forward: (seq_len, batch, D)
    seq_len, batch_size, input_size = 8, 2, 256

    key = jax.random.PRNGKey(0)
    kx, kw, kb = jax.random.split(key, 3)

    x = jax.random.normal(kx, (seq_len, batch_size, input_size), dtype=jnp.float32)
    # Deterministic synthetic parameters for nn.Linear(input_size, 1)
    bound = 1.0 / (input_size ** 0.5)
    weight = jax.random.uniform(kw, (1, input_size), minval=-bound, maxval=bound,
                                dtype=jnp.float32)
    bias = jax.random.uniform(kb, (1,), minval=-bound, maxval=bound,
                              dtype=jnp.float32)

    # 1) Default path: auto-sized row tile (single 128-row tile, ragged M=16).
    scores = logistic_regression_forward(x, weight, bias)
    jax.block_until_ready(scores)
    ref = jax.nn.sigmoid(x.reshape(-1, input_size) @ weight.T + bias)
    ref = ref.reshape(seq_len, batch_size, 1)
    assert scores.shape == (seq_len, batch_size, 1)
    assert jnp.allclose(scores, ref, atol=1e-5, rtol=1e-5)

    # 2) Multi-tile + ragged path (no pad copy): M = 320, tm=128 -> 3 tiles,
    #    last tile holds only 64 valid rows.
    x2 = jax.random.normal(kb, (5, 64, input_size), dtype=jnp.float32)
    scores2 = logistic_regression_forward(x2, weight, bias, tm=128)
    jax.block_until_ready(scores2)
    ref2 = jax.nn.sigmoid(x2.reshape(-1, input_size) @ weight.T + bias)
    ref2 = ref2.reshape(5, 64, 1)
    assert scores2.shape == (5, 64, 1)
    assert jnp.allclose(scores2, ref2, atol=1e-5, rtol=1e-5)

    # 3) bf16 streaming path (half the HBM bytes); f32 accumulation + sigmoid.
    xb = x.astype(jnp.bfloat16)
    wb = weight.astype(jnp.bfloat16)
    scores3 = logistic_regression_forward(xb, wb, bias)
    jax.block_until_ready(scores3)
    ref3 = jax.nn.sigmoid(
        xb.astype(jnp.float32).reshape(-1, input_size)
        @ wb.astype(jnp.float32).T + bias).reshape(seq_len, batch_size, 1)
    assert scores3.dtype == jnp.bfloat16
    assert jnp.allclose(scores3.astype(jnp.float32), ref3, atol=2e-2, rtol=2e-2)

    print("KERNEL_OK")
</pallas_src>

<mosaic_0001>
module attributes {stable_mosaic.version = 11 : i64} {
  func.func @_logistic_kernel(%arg0: i32, %arg1: memref<128x256xf32, #tpu.memory_space<vmem>>, %arg2: memref<1x256xf32, #tpu.memory_space<vmem>>, %arg3: memref<1xf32, #tpu.memory_space<smem>>, %arg4: memref<1x1x128xf32, #tpu.memory_space<vmem>>) attributes {dimension_semantics = [#tpu.dimension_semantics<parallel>], iteration_bounds = array<i64: 1>, scalar_prefetch = 0 : i64, scratch_operands = 0 : i64, tpu.core_type = #tpu.core_type<tc>, window_params = [{transform_indices = @transform_0, window_bounds = array<i64: 128, 256>}, {pipeline_mode = #tpu.pipeline_mode<synchronous>, transform_indices = @transform_1, window_bounds = array<i64: 1, 256>}, {transform_indices = @transform_2, window_bounds = array<i64: 1>}, {transform_indices = @transform_3, window_bounds = array<i64: 1, 1, 128>}]} {
    %c0 = arith.constant 0 : index
    %c0_0 = arith.constant 0 : index
    %0 = vector.load %arg2[%c0, %c0_0] : memref<1x256xf32, #tpu.memory_space<vmem>>, vector<1x256xf32>
    %c0_1 = arith.constant 0 : index
    %c0_2 = arith.constant 0 : index
    %1 = vector.load %arg1[%c0_1, %c0_2] : memref<128x256xf32, #tpu.memory_space<vmem>>, vector<128x256xf32>
    %cst = arith.constant dense<0.000000e+00> : vector<1x128xf32>
    %2 = tpu.matmul %0, %1, %cst {dimension_numbers = #tpu.dot_dimension_numbers<[1], [1], [0], [0], [0, 0, 1, 0], [], []>} : vector<1x256xf32>, vector<128x256xf32>, vector<1x128xf32> -> vector<1x128xf32>
    %c0_3 = arith.constant 0 : index
    %3 = memref.load %arg3[%c0_3] : memref<1xf32, #tpu.memory_space<smem>>
    %4 = vector.broadcast %3 : f32 to vector<1x128xf32>
    %5 = arith.addf %2, %4 : vector<1x128xf32>
    %6 = arith.negf %5 : vector<1x128xf32>
    %7 = math.exp %6 : vector<1x128xf32>
    %cst_4 = arith.constant 1.000000e+00 : f32
    %8 = vector.broadcast %cst_4 : f32 to vector<1x128xf32>
    %9 = arith.addf %8, %7 : vector<1x128xf32>
    %10 = arith.divf %8, %9 : vector<1x128xf32>
    %11 = vector.shape_cast %10 : vector<1x128xf32> to vector<1x1x128xf32>
    %c0_5 = arith.constant 0 : index
    %c0_6 = arith.constant 0 : index
    %c0_7 = arith.constant 0 : index
    %12 = vector.load %arg4[%c0_5, %c0_6, %c0_7] : memref<1x1x128xf32, #tpu.memory_space<vmem>>, vector<1x1x128xf32>
    tpu.vector_store %arg4[%c0_5, %c0_6, %c0_7], %11 {strides = array<i32>} : memref<1x1x128xf32, #tpu.memory_space<vmem>>, vector<1x1x128xf32>,
    return
  }
  func.func @transform_0(%arg0: i32) -> (i32, i32) {
    %c0_i32 = arith.constant 0 : i32
    %c0_i32_0 = arith.constant 0 : i32
    return %arg0, %c0_i32 : i32, i32
  }
  func.func @transform_1(%arg0: i32) -> (i32, i32) {
    %c0_i32 = arith.constant 0 : i32
    %c0_i32_0 = arith.constant 0 : i32
    %c0_i32_1 = arith.constant 0 : i32
    return %c0_i32, %c0_i32_0 : i32, i32
  }
  func.func @transform_2(%arg0: i32) -> i32 {
    %c0_i32 = arith.constant 0 : i32
    %c0_i32_0 = arith.constant 0 : i32
    return %c0_i32 : i32
  }
  func.func @transform_3(%arg0: i32) -> (i32, i32, i32) {
    %c0_i32 = arith.constant 0 : i32
    %c0_i32_0 = arith.constant 0 : i32
    %c0_i32_1 = arith.constant 0 : i32
    return %arg0, %c0_i32, %c0_i32_0 : i32, i32, i32
  }
}

</mosaic_0001>

<llo_original>
// kernel: tpu_custom_call.1
$region0: #{tpu_custom_call.1}
  #allocation0 [shape = 'u32[]', space=smem, size = 0x4, offset = 0x4, fixed_abs, tag = 'smem constant byte address 0x4 - core index']
  #allocation1 [shape = 'u32[144,128]{1,0:T(1,128)}', space=vmem, size = 0x12000, scoped, tag = 'internal scratch']
  #allocation2 [shape = 'f32[1]{0:T(128)S(6)}', space=smem, size = 0x200, scoped, tag = 'scoped memory for tpu_custom_call.1']
  %s0 = inlined_call_operand.hbm [shape: f32[16,256], index: 0, kind: input, shape index: {}]
  %s1 = inlined_call_operand.vmem [shape: f32[1,256], index: 1, kind: input, shape index: {}]
  %s2 = inlined_call_operand.<no memory space> [shape: f32[1], index: 2, kind: input, shape index: {}]
  %s3 = inlined_call_operand.hbm [shape: f32[1,1,128], index: 3, kind: output, shape index: {}]
  %s4 = sld [smem:[#allocation0]]
  $region26: #{tpu_custom_call.1} parent=0
    _
  %s6 = ssub.s32 1, %s4
  %s7 = scalar_select 0, %s6, %s4
  %8 = sst [smem:[#allocation2]] %s2
  $region1: #{tpu_custom_call.1} parent=0
    #allocation3 [shape = 'u8[131072]{0}', space=vmem, size = 0x20000, scoped, tag = 'input window, operand 0, single buffered']
    #allocation4 [shape = 's32[1]{0}', space=sflag, size = 0x4, scoped, tag = 'scoped memory for tpu_custom_call.1']
    #allocation5 [shape = 's32[1]{0}', space=sflag, size = 0x4, scoped, tag = 'scoped memory for tpu_custom_call.1']
    #allocation6 [shape = 'u8[512]{0}', space=vmem, size = 0x400, scoped, tag = 'output window, operand 0, single buffered']
    %9 = vsyncpa [#allocation4], 0
    %10 = vsyncpa [#allocation5], 0
    // Predicated region
    $region2: #{tpu_custom_call.1} parent=1 // pred_check
      _
    $region3: #{tpu_custom_call.1} parent=1 // pred_check_branch
      %12 = sbr.rel (0) target = $region5
    $region4: #{tpu_custom_call.1} parent=1 // pred_region
      %s14 = ssub.s32 4096, 512
      %15 = vsyncadd [#allocation4], %s14
      %s16 = sshll.u32 [#allocation3], 4
      %s17 = int_to_ptr.vmem [resolvable:$true] %s16
      %22 = dma.hbm_to_vmem [thread:$0]  %s0, 512, %s17, [#allocation4], 256, 256, 16
    $region5: #{tpu_custom_call.1} parent=1 // pred_fallthru
      _
    // Predicated region
    $region6: #{tpu_custom_call.1} parent=1 // pred_check
      _
    $region7: #{tpu_custom_call.1} parent=1 // pred_check_branch
      %24 = sbr.rel (0) target = $region9
    $region8: #{tpu_custom_call.1} parent=1 // pred_region
      _
    $region9: #{tpu_custom_call.1} parent=1 // pred_fallthru
      _
    // Predicated region
    $region10: #{tpu_custom_call.1} parent=1 // pred_check
      _
    $region11: #{tpu_custom_call.1} parent=1 // pred_check_branch
      %26 = sbr.rel (0) target = $region13
    $region12: #{tpu_custom_call.1} parent=1 // pred_region
      _
    $region13: #{tpu_custom_call.1} parent=1 // pred_fallthru
      _
    // Predicated region
    $region14: #{tpu_custom_call.1} parent=1 // pred_check
      _
    $region15: #{tpu_custom_call.1} parent=1 // pred_check_branch
      %28 = sbr.rel (0) target = $region17
    $region16: #{tpu_custom_call.1} parent=1 // pred_region
      %29 = dma.done [#allocation4], 4096
    $region17: #{tpu_custom_call.1} parent=1 // pred_fallthru
      _
    %v30 = vld [vmem:[%s1] sm:$0x3]
    %v31 = vld [vmem:[#allocation3] sm:$0xff]
    %v32 = vld [vmem:[#allocation3 + $0x8] sm:$0xff]
    %v33 = vld [vmem:[#allocation3 + $0x10] sm:$0xff]
    %v34 = vld [vmem:[#allocation3 + $0x18] sm:$0xff]
    %v35 = vld [vmem:[#allocation3 + $0x20] sm:$0xff]
    %v36 = vld [vmem:[#allocation3 + $0x28] sm:$0xff]
    %v37 = vld [vmem:[#allocation3 + $0x30] sm:$0xff]
    %v38 = vld [vmem:[#allocation3 + $0x38] sm:$0xff]
    %v39 = vld [vmem:[#allocation3 + $0x40] sm:$0xff]
    %v40 = vld [vmem:[#allocation3 + $0x48] sm:$0xff]
    %v41 = vld [vmem:[#allocation3 + $0x50] sm:$0xff]
    %v42 = vld [vmem:[#allocation3 + $0x58] sm:$0xff]
    %v43 = vld [vmem:[#allocation3 + $0x60] sm:$0xff]
    %v44 = vld [vmem:[#allocation3 + $0x68] sm:$0xff]
    %v45 = vld [vmem:[#allocation3 + $0x70] sm:$0xff]
    %v46 = vld [vmem:[#allocation3 + $0x78] sm:$0xff]
    %v47 = vld [vmem:[#allocation3 + $0x80] sm:$0xff]
    %v48 = vld [vmem:[#allocation3 + $0x88] sm:$0xff]
    %v49 = vld [vmem:[#allocation3 + $0x90] sm:$0xff]
    %v50 = vld [vmem:[#allocation3 + $0x98] sm:$0xff]
    %v51 = vld [vmem:[#allocation3 + $0xa0] sm:$0xff]
    %v52 = vld [vmem:[#allocation3 + $0xa8] sm:$0xff]
    %v53 = vld [vmem:[#allocation3 + $0xb0] sm:$0xff]
    %v54 = vld [vmem:[#allocation3 + $0xb8] sm:$0xff]
    %v55 = vld [vmem:[#allocation3 + $0xc0] sm:$0xff]
    %v56 = vld [vmem:[#allocation3 + $0xc8] sm:$0xff]
    %v57 = vld [vmem:[#allocation3 + $0xd0] sm:$0xff]
    %v58 = vld [vmem:[#allocation3 + $0xd8] sm:$0xff]
    %v59 = vld [vmem:[#allocation3 + $0xe0] sm:$0xff]
    %v60 = vld [vmem:[#allocation3 + $0xe8] sm:$0xff]
    %v61 = vld [vmem:[#allocation3 + $0xf0] sm:$0xff]
    %v62 = vld [vmem:[#allocation3 + $0xf8] sm:$0xff]
    %s63 = sld [smem:[#allocation2]]
    %v64 = vstv %s63
    %v66 = vlaneseq
    %v67 = vshrl.u32 %v66, 7
    %v68 = vsub.s32 0, %v67
    %v69 = vrot.slane %v30, %v68
    %v70 = vlaneseq
    %v71 = vshrl.u32 %v70, 7
    %v72 = vsub.s32 1, %v71
    %v73 = vrot.slane %v30, %v72
    %76 = vmatprep.subr.mxu0 %v62
    %77 = vmatpush1.xpose.msra.mxu0 %v61
    %78 = vmatprep.subr.mxu0 %v60
    %79 = vmatpush1.xpose.msra.mxu0 %v59
    %80 = vmatprep.subr.mxu0 %v58
    %81 = vmatpush1.xpose.msra.mxu0 %v57
    %82 = vmatprep.subr.mxu0 %v56
    %83 = vmatpush1.xpose.msra.mxu0 %v55
    %84 = vmatprep.subr.mxu0 %v54
    %85 = vmatpush1.xpose.msra.mxu0 %v53
    %86 = vmatprep.subr.mxu0 %v52
    %87 = vmatpush1.xpose.msra.mxu0 %v51
    %88 = vmatprep.subr.mxu0 %v50
    %89 = vmatpush1.xpose.msra.mxu0 %v49
    %90 = vmatprep.subr.mxu0 %v48
    %91 = vmatpush1.xpose.msra.mxu0 %v47
    %92 = vmatprep.subr.mxu0 %v46
    %93 = vmatpush1.xpose.msra.mxu0 %v45
    %94 = vmatprep.subr.mxu0 %v44
    %95 = vmatpush1.xpose.msra.mxu0 %v43
    %96 = vmatprep.subr.mxu0 %v42
    %97 = vmatpush1.xpose.msra.mxu0 %v41
    %98 = vmatprep.subr.mxu0 %v40
    %99 = vmatpush1.xpose.msra.mxu0 %v39
    %100 = vmatprep.subr.mxu0 %v38
    %101 = vmatpush1.xpose.msra.mxu0 %v37
    %102 = vmatprep.subr.mxu0 %v36
    %103 = vmatpush1.xpose.msra.mxu0 %v35
    %104 = vmatprep.subr.mxu0 %v34
    %105 = vmatpush1.xpose.msra.mxu0 %v33
    %106 = vmatprep.subr.mxu0 %v32
    %107 = vmatpush1.xpose.msra.mxu0 %v31
    %108 = vmatprep.subr.mxu0 0.0
    %109 = vmatpush2.xpose.msra.mxu0 0.0
    %110 = vmatprep.subr.mxu0 0.0
    %111 = vmatpush2.xpose.msra.mxu0 0.0
    %112 = vmatprep.subr.mxu0 0.0
    %113 = vmatpush2.xpose.msra.mxu0 0.0
    %114 = vmatprep.subr.mxu0 0.0
    %115 = vmatpush2.xpose.msra.mxu0 0.0
    %116 = vmatprep.subr.mxu0 0.0
    %117 = vmatpush2.xpose.msra.mxu0 0.0
    %118 = vmatprep.subr.mxu0 0.0
    %119 = vmatpush2.xpose.msra.mxu0 0.0
    %120 = vmatprep.subr.mxu0 0.0
    %121 = vmatpush2.xpose.msra.mxu0 0.0
    %122 = vmatprep.subr.mxu0 0.0
    %123 = vmatpush2.xpose.msra.mxu0 0.0
    %124 = vmatprep.subr.mxu0 0.0
    %125 = vmatpush2.xpose.msra.mxu0 0.0
    %126 = vmatprep.subr.mxu0 0.0
    %127 = vmatpush2.xpose.msra.mxu0 0.0
    %128 = vmatprep.subr.mxu0 0.0
    %129 = vmatpush2.xpose.msra.mxu0 0.0
    %130 = vmatprep.subr.mxu0 0.0
    %131 = vmatpush2.xpose.msra.mxu0 0.0
    %132 = vmatprep.subr.mxu0 0.0
    %133 = vmatpush2.xpose.msra.mxu0 0.0
    %134 = vmatprep.subr.mxu0 0.0
    %135 = vmatpush2.xpose.msra.mxu0 0.0
    %136 = vmatprep.subr.mxu0 0.0
    %137 = vmatpush2.xpose.msra.mxu0 0.0
    %138 = vmatprep.subr.mxu0 0.0
    %139 = vmatpush2.xpose.msra.mxu0 0.0
    %140 = vmatprep.mubr.f32.mxu0 %v73
    %141 = vmatmul.mubr.f32.gmra.mxu0 %v69
    %v142 = vpop.f32.mrf.mxu0
    %v143 = vadd.f32 %v64, %v142
    %v144 = vpop.f32.mrf.mxu0
    %145 = vdwg.mxu0
    %v146 = vxor.u32 %v143, 2147483648
    %v147 = vmul.f32 %v146, 1.442695
    %v148 = vpow.pop %v147
    %v149 = vadd.f32 %v148, 1.0
    %v150 = vrcp.pop %v149
    %v151 = vmul.f32 1.0, %v150
    %152 = vst [vmem:[#allocation6] sm:$0x1] %v151
    // Predicated region
    $region18: #{tpu_custom_call.1} parent=1 // pred_check
      _
    $region19: #{tpu_custom_call.1} parent=1 // pred_check_branch
      %154 = sbr.rel (0) target = $region21
    $region20: #{tpu_custom_call.1} parent=1 // pred_region
      %s156 = ssub.s32 16, 16
      %157 = vsyncadd [#allocation5], %s156
      %s159 = sshll.u32 [#allocation6], 4
      %s160 = int_to_ptr.vmem [resolvable:$true] %s159
      %162 = dma.vmem_to_hbm [thread:$0]  %s160, 16, %s3, [#allocation5]
    $region21: #{tpu_custom_call.1} parent=1 // pred_fallthru
      _
    // Predicated region
    $region22: #{tpu_custom_call.1} parent=1 // pred_check
      _
    $region23: #{tpu_custom_call.1} parent=1 // pred_check_branch
      %164 = sbr.rel (0) target = $region25
    $region24: #{tpu_custom_call.1} parent=1 // pred_region
      %165 = dma.done [#allocation5], 16
    $region25: #{tpu_custom_call.1} parent=1 // pred_fallthru
      _
    %166 = vsyncpa [#allocation4], 1
    %167 = vsyncpa [#allocation5], 1

</llo_original>
